<compile_context>
chip_gen: v5e
topology: v5e:2x2
jax: 0.10.0
libtpu: 0.0.40
codegen_flags: <defaults>
</compile_context>

<pallas_src>
import functools

import jax
import jax.numpy as jnp
from jax.experimental import pallas as pl
from jax.experimental.pallas import tpu as pltpu


def _combine_kernel(w_ref, x1_ref, x2_ref, x3_ref, x4_ref,
                    o1_ref, o2_ref, o3_ref, o4_ref):
    """Weighted combine for one (batch, spatial-tile) grid cell.

    w_ref : (4, 4, c)  residual-folded softmax weights, w[i, m, c]
    x*_ref: (c, TS)    spatial tile of modality m
    o*_ref: (c, TS)    out_i[c, s] = sum_m w[i, m, c] * x_m[c, s]
                       (residual x_i already folded into w[i, i, :])
    """
    # Load each modality tile exactly once (4 VMEM loads instead of 16) and
    # promote to f32 for accumulation.
    xs = tuple(r[...].astype(jnp.float32)
               for r in (x1_ref, x2_ref, x3_ref, x4_ref))
    w = w_ref[...].astype(jnp.float32)                 # (4, 4, c) -- tiny
    o_refs = (o1_ref, o2_ref, o3_ref, o4_ref)
    for i in range(4):                                 # static unroll over heads
        wi = w[i]                                      # (4, c)
        acc = wi[0, :, None] * xs[0]
        acc = acc + wi[1, :, None] * xs[1]
        acc = acc + wi[2, :, None] * xs[2]
        acc = acc + wi[3, :, None] * xs[3]
        o_refs[i][...] = acc.astype(o_refs[i].dtype)


def _pick_spatial_tile(S, c, target_bytes=512 * 1024):
    """Largest multiple of 128 dividing S with per-buffer bytes <= ~target.

    With 8 big streams (4 in + 4 out) double-buffered, a 512 KiB per-buffer
    target keeps total VMEM ~8 MiB -- inside default scoped limits on
    v5e/v6e/v7x.  Falls back to the full extent S (always a legal block
    shape) if S has no suitable multiple-of-128 divisor (ragged last dim).
    """
    cap = max(128, (target_bytes // (4 * max(c, 1))) // 128 * 128)
    start = (min(cap, S) // 128) * 128
    for ts in range(start, 127, -128):
        if S % ts == 0:
            return ts
    return S


@jax.jit
def final_diff_code_block(x1, x2, x3, x4, mod_code, params):
    """JAX/Pallas equivalent of fianl_diff_code_block.forward."""
    W1, b1, W2, b2 = params       # W1: (2c, 4c), b1: (2c,), W2: (c, 2c), b2: (c,)
    b, c, h, w, l = x1.shape
    S = h * w * l
    out_dtype = x1.dtype

    # (b, c, S) views of contiguous arrays: no HBM copies.
    xs = tuple(x.reshape(b, c, S) for x in (x1, x2, x3, x4))

    # ---- tiny weight path (per-batch 4x4 MLP + softmax), plain-JAX glue ----
    Xm = jnp.stack([x.astype(jnp.float32).mean(-1) for x in xs], axis=1)  # (b,4,c)
    Xj = jnp.broadcast_to(Xm[:, None, :, :], (b, 4, 4, c))   # [b,i,j,:] = Xm[b,j]
    Xi = jnp.broadcast_to(Xm[:, :, None, :], (b, 4, 4, c))   # [b,i,j,:] = Xm[b,i]
    modr = jnp.broadcast_to(
        mod_code.astype(jnp.float32)[:, None, :, None], (b, 4, 4, 2 * c))
    feat = jnp.concatenate([Xj, Xi, modr], axis=-1)           # (b,4,4,4c)
    hid = feat @ W1.T + b1
    hid = jnp.where(hid > 0, hid, 0.01 * hid)                 # LeakyReLU(0.01)
    logits = hid @ W2.T + b2                                  # (b,4,4,c)
    wgt = jax.nn.softmax(logits, axis=2)                      # softmax over modality j
    # Fold the residual `x_i + ...` into the combine weights: w[i, i, :] += 1.
    wgt = wgt + jnp.eye(4, dtype=wgt.dtype)[None, :, :, None]

    # ---- Pallas streaming combine: grid over (batch, spatial tiles) --------
    TS = _pick_spatial_tile(S, c)
    grid = (b, S // TS)

    x_spec = pl.BlockSpec((None, c, TS), lambda bi, sj: (bi, 0, sj))
    w_spec = pl.BlockSpec((None, 4, 4, c), lambda bi, sj: (bi, 0, 0, 0))

    outs = pl.pallas_call(
        _combine_kernel,
        out_shape=tuple(
            jax.ShapeDtypeStruct((b, c, S), out_dtype) for _ in range(4)),
        grid_spec=pltpu.PrefetchScalarGridSpec(
            num_scalar_prefetch=0,
            grid=grid,
            in_specs=[w_spec, x_spec, x_spec, x_spec, x_spec],
            out_specs=[x_spec, x_spec, x_spec, x_spec],
        ),
        compiler_params=pltpu.CompilerParams(
            dimension_semantics=("parallel", "parallel")),
    )(wgt, *xs)

    return tuple(o.reshape(b, c, h, w, l) for o in outs)


def reference(x1, x2, x3, x4, mod_code, params):
    """Pure-JAX mirror of the PyTorch forward, for verification."""
    W1, b1, W2, b2 = params
    b, c, h, w, l = x1.shape
    X_ori = jnp.stack([x1, x2, x3, x4], axis=1)            # (b,4,c,h,w,l)
    Xv = X_ori.reshape(b, 4, c, h * w * l)
    X = Xv.mean(-1)                                        # (b,4,c)
    X1_ = jnp.broadcast_to(X[:, None, :, :], (b, 4, 4, c))
    X2_ = jnp.broadcast_to(X[:, :, None, :], (b, 4, 4, c))
    X_R = jnp.concatenate([X1_, X2_], -1)                  # (b,4,4,2c)
    modr = jnp.broadcast_to(mod_code[:, :, None], (b, 4, 2 * c))

    def relation(f):
        hh = f @ W1.T + b1
        hh = jnp.where(hh > 0, hh, 0.01 * hh)
        return hh @ W2.T + b2

    xs = (x1, x2, x3, x4)
    outs = []
    for i in range(4):
        feat = jnp.concatenate([X_R[:, i, :, :], modr], -1)   # (b,4,4c)
        o = relation(feat)                                    # (b,4,c)
        wgt = jax.nn.softmax(o, axis=1)
        Xout = jnp.einsum('bmcs,bmc->bcs', Xv, wgt).reshape(b, c, h, w, l)
        outs.append(xs[i] + Xout)
    return tuple(outs)


if __name__ == "__main__":
    key = jax.random.PRNGKey(0)
    b, c, h, w, l = 2, 8, 8, 8, 8

    k = jax.random.split(key, 10)
    x1 = jax.random.normal(k[0], (b, c, h, w, l), jnp.float32)
    x2 = jax.random.normal(k[1], (b, c, h, w, l), jnp.float32)
    x3 = jax.random.normal(k[2], (b, c, h, w, l), jnp.float32)
    x4 = jax.random.normal(k[3], (b, c, h, w, l), jnp.float32)
    mod_code = jax.random.normal(k[4], (b, 4), jnp.float32)

    # Deterministic synthetic params for Relation1 (Relation2/3/4 are unused
    # in the PyTorch forward, so they have no equivalent here).
    W1 = 0.1 * jax.random.normal(k[5], (2 * c, 4 * c), jnp.float32)
    b1 = 0.1 * jax.random.normal(k[6], (2 * c,), jnp.float32)
    W2 = 0.1 * jax.random.normal(k[7], (c, 2 * c), jnp.float32)
    b2 = 0.1 * jax.random.normal(k[8], (c,), jnp.float32)
    params = (W1, b1, W2, b2)

    outs = final_diff_code_block(x1, x2, x3, x4, mod_code, params)
    outs = jax.block_until_ready(outs)

    refs = reference(x1, x2, x3, x4, mod_code, params)
    for o, r in zip(outs, refs):
        err = float(jnp.max(jnp.abs(o - r)))
        assert err < 1e-4, f"mismatch: {err}"

    print("KERNEL_OK")
</pallas_src>

<mosaic_0001>
module attributes {stable_mosaic.version = 11 : i64} {
  func.func @_combine_kernel(%arg0: i32, %arg1: i32, %arg2: memref<1x4x4x8xf32, #tpu.memory_space<vmem>>, %arg3: memref<1x8x512xf32, #tpu.memory_space<vmem>>, %arg4: memref<1x8x512xf32, #tpu.memory_space<vmem>>, %arg5: memref<1x8x512xf32, #tpu.memory_space<vmem>>, %arg6: memref<1x8x512xf32, #tpu.memory_space<vmem>>, %arg7: memref<1x8x512xf32, #tpu.memory_space<vmem>>, %arg8: memref<1x8x512xf32, #tpu.memory_space<vmem>>, %arg9: memref<1x8x512xf32, #tpu.memory_space<vmem>>, %arg10: memref<1x8x512xf32, #tpu.memory_space<vmem>>) attributes {dimension_semantics = [#tpu.dimension_semantics<parallel>, #tpu.dimension_semantics<parallel>], iteration_bounds = array<i64: 2, 1>, scalar_prefetch = 0 : i64, scratch_operands = 0 : i64, tpu.core_type = #tpu.core_type<tc>, window_params = [{transform_indices = @transform_0, window_bounds = array<i64: 1, 4, 4, 8>}, {transform_indices = @transform_1, window_bounds = array<i64: 1, 8, 512>}, {transform_indices = @transform_2, window_bounds = array<i64: 1, 8, 512>}, {transform_indices = @transform_3, window_bounds = array<i64: 1, 8, 512>}, {transform_indices = @transform_4, window_bounds = array<i64: 1, 8, 512>}, {transform_indices = @transform_5, window_bounds = array<i64: 1, 8, 512>}, {transform_indices = @transform_6, window_bounds = array<i64: 1, 8, 512>}, {transform_indices = @transform_7, window_bounds = array<i64: 1, 8, 512>}, {transform_indices = @transform_8, window_bounds = array<i64: 1, 8, 512>}]} {
    %c0 = arith.constant 0 : index
    %c0_0 = arith.constant 0 : index
    %c0_1 = arith.constant 0 : index
    %0 = vector.load %arg3[%c0, %c0_0, %c0_1] : memref<1x8x512xf32, #tpu.memory_space<vmem>>, vector<1x8x512xf32>
    %1 = vector.shape_cast %0 : vector<1x8x512xf32> to vector<8x512xf32>
    %c0_2 = arith.constant 0 : index
    %c0_3 = arith.constant 0 : index
    %c0_4 = arith.constant 0 : index
    %2 = vector.load %arg4[%c0_2, %c0_3, %c0_4] : memref<1x8x512xf32, #tpu.memory_space<vmem>>, vector<1x8x512xf32>
    %3 = vector.shape_cast %2 : vector<1x8x512xf32> to vector<8x512xf32>
    %c0_5 = arith.constant 0 : index
    %c0_6 = arith.constant 0 : index
    %c0_7 = arith.constant 0 : index
    %4 = vector.load %arg5[%c0_5, %c0_6, %c0_7] : memref<1x8x512xf32, #tpu.memory_space<vmem>>, vector<1x8x512xf32>
    %5 = vector.shape_cast %4 : vector<1x8x512xf32> to vector<8x512xf32>
    %c0_8 = arith.constant 0 : index
    %c0_9 = arith.constant 0 : index
    %c0_10 = arith.constant 0 : index
    %6 = vector.load %arg6[%c0_8, %c0_9, %c0_10] : memref<1x8x512xf32, #tpu.memory_space<vmem>>, vector<1x8x512xf32>
    %7 = vector.shape_cast %6 : vector<1x8x512xf32> to vector<8x512xf32>
    %c0_11 = arith.constant 0 : index
    %c0_12 = arith.constant 0 : index
    %c0_13 = arith.constant 0 : index
    %c0_14 = arith.constant 0 : index
    %8 = vector.load %arg2[%c0_11, %c0_12, %c0_13, %c0_14] : memref<1x4x4x8xf32, #tpu.memory_space<vmem>>, vector<1x4x4x8xf32>
    %9 = vector.shape_cast %8 : vector<1x4x4x8xf32> to vector<4x4x8xf32>
    %10 = vector.extract_strided_slice %9 {offsets = [0, 0, 0], sizes = [1, 4, 8], strides = [1, 1, 1]} : vector<4x4x8xf32> to vector<1x4x8xf32>
    %11 = vector.shape_cast %10 : vector<1x4x8xf32> to vector<4x8xf32>
    %12 = vector.extract_strided_slice %11 {offsets = [0, 0], sizes = [1, 8], strides = [1, 1]} : vector<4x8xf32> to vector<1x8xf32>
    %13 = vector.shape_cast %12 : vector<1x8xf32> to vector<8xf32>
    %14 = vector.shape_cast %13 : vector<8xf32> to vector<8x1xf32>
    %15 = vector.broadcast %14 : vector<8x1xf32> to vector<8x512xf32>
    %16 = arith.mulf %15, %1 : vector<8x512xf32>
    %17 = vector.extract_strided_slice %11 {offsets = [1, 0], sizes = [1, 8], strides = [1, 1]} : vector<4x8xf32> to vector<1x8xf32>
    %18 = vector.shape_cast %17 : vector<1x8xf32> to vector<8xf32>
    %19 = vector.shape_cast %18 : vector<8xf32> to vector<8x1xf32>
    %20 = vector.broadcast %19 : vector<8x1xf32> to vector<8x512xf32>
    %21 = arith.mulf %20, %3 : vector<8x512xf32>
    %22 = arith.addf %16, %21 : vector<8x512xf32>
    %23 = vector.extract_strided_slice %11 {offsets = [2, 0], sizes = [1, 8], strides = [1, 1]} : vector<4x8xf32> to vector<1x8xf32>
    %24 = vector.shape_cast %23 : vector<1x8xf32> to vector<8xf32>
    %25 = vector.shape_cast %24 : vector<8xf32> to vector<8x1xf32>
    %26 = vector.broadcast %25 : vector<8x1xf32> to vector<8x512xf32>
    %27 = arith.mulf %26, %5 : vector<8x512xf32>
    %28 = arith.addf %22, %27 : vector<8x512xf32>
    %29 = vector.extract_strided_slice %11 {offsets = [3, 0], sizes = [1, 8], strides = [1, 1]} : vector<4x8xf32> to vector<1x8xf32>
    %30 = vector.shape_cast %29 : vector<1x8xf32> to vector<8xf32>
    %31 = vector.shape_cast %30 : vector<8xf32> to vector<8x1xf32>
    %32 = vector.broadcast %31 : vector<8x1xf32> to vector<8x512xf32>
    %33 = arith.mulf %32, %7 : vector<8x512xf32>
    %34 = arith.addf %28, %33 : vector<8x512xf32>
    %c0_15 = arith.constant 0 : index
    %c0_16 = arith.constant 0 : index
    %c0_17 = arith.constant 0 : index
    %35 = vector.load %arg7[%c0_15, %c0_16, %c0_17] : memref<1x8x512xf32, #tpu.memory_space<vmem>>, vector<1x8x512xf32>
    %36 = vector.shape_cast %35 : vector<1x8x512xf32> to vector<8x512xf32>
    %37 = vector.shape_cast %34 : vector<8x512xf32> to vector<1x8x512xf32>
    tpu.vector_store %arg7[%c0_15, %c0_16, %c0_17], %37 {strides = array<i32>} : memref<1x8x512xf32, #tpu.memory_space<vmem>>, vector<1x8x512xf32>,
    %38 = vector.extract_strided_slice %9 {offsets = [1, 0, 0], sizes = [1, 4, 8], strides = [1, 1, 1]} : vector<4x4x8xf32> to vector<1x4x8xf32>
    %39 = vector.shape_cast %38 : vector<1x4x8xf32> to vector<4x8xf32>
    %40 = vector.extract_strided_slice %39 {offsets = [0, 0], sizes = [1, 8], strides = [1, 1]} : vector<4x8xf32> to vector<1x8xf32>
    %41 = vector.shape_cast %40 : vector<1x8xf32> to vector<8xf32>
    %42 = vector.shape_cast %41 : vector<8xf32> to vector<8x1xf32>
    %43 = vector.broadcast %42 : vector<8x1xf32> to vector<8x512xf32>
    %44 = arith.mulf %43, %1 : vector<8x512xf32>
    %45 = vector.extract_strided_slice %39 {offsets = [1, 0], sizes = [1, 8], strides = [1, 1]} : vector<4x8xf32> to vector<1x8xf32>
    %46 = vector.shape_cast %45 : vector<1x8xf32> to vector<8xf32>
    %47 = vector.shape_cast %46 : vector<8xf32> to vector<8x1xf32>
    %48 = vector.broadcast %47 : vector<8x1xf32> to vector<8x512xf32>
    %49 = arith.mulf %48, %3 : vector<8x512xf32>
    %50 = arith.addf %44, %49 : vector<8x512xf32>
    %51 = vector.extract_strided_slice %39 {offsets = [2, 0], sizes = [1, 8], strides = [1, 1]} : vector<4x8xf32> to vector<1x8xf32>
    %52 = vector.shape_cast %51 : vector<1x8xf32> to vector<8xf32>
    %53 = vector.shape_cast %52 : vector<8xf32> to vector<8x1xf32>
    %54 = vector.broadcast %53 : vector<8x1xf32> to vector<8x512xf32>
    %55 = arith.mulf %54, %5 : vector<8x512xf32>
    %56 = arith.addf %50, %55 : vector<8x512xf32>
    %57 = vector.extract_strided_slice %39 {offsets = [3, 0], sizes = [1, 8], strides = [1, 1]} : vector<4x8xf32> to vector<1x8xf32>
    %58 = vector.shape_cast %57 : vector<1x8xf32> to vector<8xf32>
    %59 = vector.shape_cast %58 : vector<8xf32> to vector<8x1xf32>
    %60 = vector.broadcast %59 : vector<8x1xf32> to vector<8x512xf32>
    %61 = arith.mulf %60, %7 : vector<8x512xf32>
    %62 = arith.addf %56, %61 : vector<8x512xf32>
    %c0_18 = arith.constant 0 : index
    %c0_19 = arith.constant 0 : index
    %c0_20 = arith.constant 0 : index
    %63 = vector.load %arg8[%c0_18, %c0_19, %c0_20] : memref<1x8x512xf32, #tpu.memory_space<vmem>>, vector<1x8x512xf32>
    %64 = vector.shape_cast %63 : vector<1x8x512xf32> to vector<8x512xf32>
    %65 = vector.shape_cast %62 : vector<8x512xf32> to vector<1x8x512xf32>
    tpu.vector_store %arg8[%c0_18, %c0_19, %c0_20], %65 {strides = array<i32>} : memref<1x8x512xf32, #tpu.memory_space<vmem>>, vector<1x8x512xf32>,
    %66 = vector.extract_strided_slice %9 {offsets = [2, 0, 0], sizes = [1, 4, 8], strides = [1, 1, 1]} : vector<4x4x8xf32> to vector<1x4x8xf32>
    %67 = vector.shape_cast %66 : vector<1x4x8xf32> to vector<4x8xf32>
    %68 = vector.extract_strided_slice %67 {offsets = [0, 0], sizes = [1, 8], strides = [1, 1]} : vector<4x8xf32> to vector<1x8xf32>
    %69 = vector.shape_cast %68 : vector<1x8xf32> to vector<8xf32>
    %70 = vector.shape_cast %69 : vector<8xf32> to vector<8x1xf32>
    %71 = vector.broadcast %70 : vector<8x1xf32> to vector<8x512xf32>
    %72 = arith.mulf %71, %1 : vector<8x512xf32>
    %73 = vector.extract_strided_slice %67 {offsets = [1, 0], sizes = [1, 8], strides = [1, 1]} : vector<4x8xf32> to vector<1x8xf32>
    %74 = vector.shape_cast %73 : vector<1x8xf32> to vector<8xf32>
    %75 = vector.shape_cast %74 : vector<8xf32> to vector<8x1xf32>
    %76 = vector.broadcast %75 : vector<8x1xf32> to vector<8x512xf32>
    %77 = arith.mulf %76, %3 : vector<8x512xf32>
    %78 = arith.addf %72, %77 : vector<8x512xf32>
    %79 = vector.extract_strided_slice %67 {offsets = [2, 0], sizes = [1, 8], strides = [1, 1]} : vector<4x8xf32> to vector<1x8xf32>
    %80 = vector.shape_cast %79 : vector<1x8xf32> to vector<8xf32>
    %81 = vector.shape_cast %80 : vector<8xf32> to vector<8x1xf32>
    %82 = vector.broadcast %81 : vector<8x1xf32> to vector<8x512xf32>
    %83 = arith.mulf %82, %5 : vector<8x512xf32>
    %84 = arith.addf %78, %83 : vector<8x512xf32>
    %85 = vector.extract_strided_slice %67 {offsets = [3, 0], sizes = [1, 8], strides = [1, 1]} : vector<4x8xf32> to vector<1x8xf32>
    %86 = vector.shape_cast %85 : vector<1x8xf32> to vector<8xf32>
    %87 = vector.shape_cast %86 : vector<8xf32> to vector<8x1xf32>
    %88 = vector.broadcast %87 : vector<8x1xf32> to vector<8x512xf32>
    %89 = arith.mulf %88, %7 : vector<8x512xf32>
    %90 = arith.addf %84, %89 : vector<8x512xf32>
    %c0_21 = arith.constant 0 : index
    %c0_22 = arith.constant 0 : index
    %c0_23 = arith.constant 0 : index
    %91 = vector.load %arg9[%c0_21, %c0_22, %c0_23] : memref<1x8x512xf32, #tpu.memory_space<vmem>>, vector<1x8x512xf32>
    %92 = vector.shape_cast %91 : vector<1x8x512xf32> to vector<8x512xf32>
    %93 = vector.shape_cast %90 : vector<8x512xf32> to vector<1x8x512xf32>
    tpu.vector_store %arg9[%c0_21, %c0_22, %c0_23], %93 {strides = array<i32>} : memref<1x8x512xf32, #tpu.memory_space<vmem>>, vector<1x8x512xf32>,
    %94 = vector.extract_strided_slice %9 {offsets = [3, 0, 0], sizes = [1, 4, 8], strides = [1, 1, 1]} : vector<4x4x8xf32> to vector<1x4x8xf32>
    %95 = vector.shape_cast %94 : vector<1x4x8xf32> to vector<4x8xf32>
    %96 = vector.extract_strided_slice %95 {offsets = [0, 0], sizes = [1, 8], strides = [1, 1]} : vector<4x8xf32> to vector<1x8xf32>
    %97 = vector.shape_cast %96 : vector<1x8xf32> to vector<8xf32>
    %98 = vector.shape_cast %97 : vector<8xf32> to vector<8x1xf32>
    %99 = vector.broadcast %98 : vector<8x1xf32> to vector<8x512xf32>
    %100 = arith.mulf %99, %1 : vector<8x512xf32>
    %101 = vector.extract_strided_slice %95 {offsets = [1, 0], sizes = [1, 8], strides = [1, 1]} : vector<4x8xf32> to vector<1x8xf32>
    %102 = vector.shape_cast %101 : vector<1x8xf32> to vector<8xf32>
    %103 = vector.shape_cast %102 : vector<8xf32> to vector<8x1xf32>
    %104 = vector.broadcast %103 : vector<8x1xf32> to vector<8x512xf32>
    %105 = arith.mulf %104, %3 : vector<8x512xf32>
    %106 = arith.addf %100, %105 : vector<8x512xf32>
    %107 = vector.extract_strided_slice %95 {offsets = [2, 0], sizes = [1, 8], strides = [1, 1]} : vector<4x8xf32> to vector<1x8xf32>
    %108 = vector.shape_cast %107 : vector<1x8xf32> to vector<8xf32>
    %109 = vector.shape_cast %108 : vector<8xf32> to vector<8x1xf32>
    %110 = vector.broadcast %109 : vector<8x1xf32> to vector<8x512xf32>
    %111 = arith.mulf %110, %5 : vector<8x512xf32>
    %112 = arith.addf %106, %111 : vector<8x512xf32>
    %113 = vector.extract_strided_slice %95 {offsets = [3, 0], sizes = [1, 8], strides = [1, 1]} : vector<4x8xf32> to vector<1x8xf32>
    %114 = vector.shape_cast %113 : vector<1x8xf32> to vector<8xf32>
    %115 = vector.shape_cast %114 : vector<8xf32> to vector<8x1xf32>
    %116 = vector.broadcast %115 : vector<8x1xf32> to vector<8x512xf32>
    %117 = arith.mulf %116, %7 : vector<8x512xf32>
    %118 = arith.addf %112, %117 : vector<8x512xf32>
    %c0_24 = arith.constant 0 : index
    %c0_25 = arith.constant 0 : index
    %c0_26 = arith.constant 0 : index
    %119 = vector.load %arg10[%c0_24, %c0_25, %c0_26] : memref<1x8x512xf32, #tpu.memory_space<vmem>>, vector<1x8x512xf32>
    %120 = vector.shape_cast %119 : vector<1x8x512xf32> to vector<8x512xf32>
    %121 = vector.shape_cast %118 : vector<8x512xf32> to vector<1x8x512xf32>
    tpu.vector_store %arg10[%c0_24, %c0_25, %c0_26], %121 {strides = array<i32>} : memref<1x8x512xf32, #tpu.memory_space<vmem>>, vector<1x8x512xf32>,
    return
  }
  func.func @transform_0(%arg0: i32, %arg1: i32) -> (i32, i32, i32, i32) {
    %c0_i32 = arith.constant 0 : i32
    %c0_i32_0 = arith.constant 0 : i32
    %c0_i32_1 = arith.constant 0 : i32
    %c0_i32_2 = arith.constant 0 : i32
    return %arg0, %c0_i32, %c0_i32_0, %c0_i32_1 : i32, i32, i32, i32
  }
  func.func @transform_1(%arg0: i32, %arg1: i32) -> (i32, i32, i32) {
    %c0_i32 = arith.constant 0 : i32
    %c0_i32_0 = arith.constant 0 : i32
    return %arg0, %c0_i32, %arg1 : i32, i32, i32
  }
  func.func @transform_2(%arg0: i32, %arg1: i32) -> (i32, i32, i32) {
    %c0_i32 = arith.constant 0 : i32
    %c0_i32_0 = arith.constant 0 : i32
    return %arg0, %c0_i32, %arg1 : i32, i32, i32
  }
  func.func @transform_3(%arg0: i32, %arg1: i32) -> (i32, i32, i32) {
    %c0_i32 = arith.constant 0 : i32
    %c0_i32_0 = arith.constant 0 : i32
    return %arg0, %c0_i32, %arg1 : i32, i32, i32
  }
  func.func @transform_4(%arg0: i32, %arg1: i32) -> (i32, i32, i32) {
    %c0_i32 = arith.constant 0 : i32
    %c0_i32_0 = arith.constant 0 : i32
    return %arg0, %c0_i32, %arg1 : i32, i32, i32
  }
  func.func @transform_5(%arg0: i32, %arg1: i32) -> (i32, i32, i32) {
    %c0_i32 = arith.constant 0 : i32
    %c0_i32_0 = arith.constant 0 : i32
    return %arg0, %c0_i32, %arg1 : i32, i32, i32
  }
  func.func @transform_6(%arg0: i32, %arg1: i32) -> (i32, i32, i32) {
    %c0_i32 = arith.constant 0 : i32
    %c0_i32_0 = arith.constant 0 : i32
    return %arg0, %c0_i32, %arg1 : i32, i32, i32
  }
  func.func @transform_7(%arg0: i32, %arg1: i32) -> (i32, i32, i32) {
    %c0_i32 = arith.constant 0 : i32
    %c0_i32_0 = arith.constant 0 : i32
    return %arg0, %c0_i32, %arg1 : i32, i32, i32
  }
  func.func @transform_8(%arg0: i32, %arg1: i32) -> (i32, i32, i32) {
    %c0_i32 = arith.constant 0 : i32
    %c0_i32_0 = arith.constant 0 : i32
    return %arg0, %c0_i32, %arg1 : i32, i32, i32
  }
}

</mosaic_0001>

<llo_original>
// kernel: final_diff_code_block.1
$region0: #{final_diff_code_block.1}
  #allocation0 [shape = 'u32[]', space=smem, size = 0x4, offset = 0x4, fixed_abs, tag = 'smem constant byte address 0x4 - core index']
  #allocation1 [shape = 'u32[72,128]{1,0:T(1,128)}', space=vmem, size = 0x9000, scoped, tag = 'internal scratch']
  %s0 = inlined_call_operand.vmem [shape: f32[2,4,4,8], index: 0, kind: input, shape index: {}]
  %s1 = inlined_call_operand.vmem [shape: f32[2,8,512], index: 1, kind: input, shape index: {}]
  %s2 = inlined_call_operand.vmem [shape: f32[2,8,512], index: 2, kind: input, shape index: {}]
  %s3 = inlined_call_operand.vmem [shape: f32[2,8,512], index: 3, kind: input, shape index: {}]
  %s4 = inlined_call_operand.vmem [shape: f32[2,8,512], index: 4, kind: input, shape index: {}]
  %s5 = inlined_call_operand.vmem [shape: f32[2,8,512], index: 5, kind: output, shape index: {0}]
  %s6 = inlined_call_operand.vmem [shape: f32[2,8,512], index: 6, kind: output, shape index: {1}]
  %s7 = inlined_call_operand.vmem [shape: f32[2,8,512], index: 7, kind: output, shape index: {2}]
  %s8 = inlined_call_operand.vmem [shape: f32[2,8,512], index: 8, kind: output, shape index: {3}]
  %9 = xla_tuple %s5, %s6, %s7, %s8
  %s10 = sld [smem:[#allocation0]]
  $region77: #{final_diff_code_block.1} parent=0
    _
  %s12 = ssub.s32 1, %s10
  %s13 = scalar_select 0, %s12, %s10
  loop: start=0, step=1, limit=4
  $region2: #{final_diff_code_block.1} parent=0 // loop_pre_header
    _
  $region3: #{final_diff_code_block.1} parent=0 // loop_header
    %s15 = sphi 0, %s19
    %p16 = scmp.ge.s32.totalorder %s15, 4
    %s22 = sphi 0, %s34
    %s23 = sphi 0, %s30
    %s24 = sphi 0, %s22
    %s25 = sphi 0, %s23
    %s26 = sphi 0, %s24
    %s27 = sphi 0, %s25
    %s37 = sphi 0, %s39
    %s40 = sphi 0, %s37
    %s41 = sphi 0, %s40
    %s57 = sphi 0, %s41
    %s65 = sphi 0, %s67
    %s68 = sphi 0, %s65
    %s69 = sphi 0, %s68
    %s85 = sphi 0, %s69
    %s93 = sphi 0, %s95
    %s96 = sphi 0, %s93
    %s97 = sphi 0, %s96
    %s113 = sphi 0, %s97
    %s121 = sphi 0, %s123
    %s124 = sphi 0, %s121
    %s125 = sphi 0, %s124
    %s141 = sphi 0, %s125
    %s149 = sphi 0, %s151
    %s152 = sphi 0, %s149
    %s153 = sphi 0, %s152
    %s169 = sphi 0, %s153
    %s177 = sphi 0, %s179
    %s180 = sphi 0, %s177
    %s181 = sphi 0, %s180
    %s197 = sphi 0, %s181
    %s205 = sphi 0, %s207
    %s208 = sphi 0, %s205
    %s209 = sphi 0, %s208
    %s225 = sphi 0, %s209
    %s233 = sphi 0, %s235
    %s236 = sphi 0, %s233
    %s237 = sphi 0, %s236
    %s253 = sphi 0, %s237
    %s261 = sphi 0, %s263
    %s264 = sphi 0, %s261
    %s265 = sphi 0, %s264
    %s281 = sphi 0, %s265
  $region4: #{final_diff_code_block.1} parent=0 // loop_header_branch
    %18 = sbr.rel (%p16) target = $region8
  $region5: #{final_diff_code_block.1} parent=0 // loop_body
    %s20 = ssub.s32 %s15, 1
    %s21 = ssub.s32 %s15, 2
    %s28 = sadd.s32 1, %s23
    %p29 = scmp.ge.s32.totalorder %s28, 1
    %s30 = scalar_select %p29, 0, %s28
    %s31 = sadd.s32 1, %s22
    %s32 = scalar_select %p29, %s31, %s22
    %p33 = scmp.ge.s32.totalorder %s32, 2
    %s34 = scalar_select %p33, 0, %s32
    %s35 = ssub.s32 %s22, %s34
    %p36 = scmp.eq.s32.totalorder %s35, 0
    %s38 = sadd.s32 %s37, 1
    %s39 = scalar_select %p36, %s37, %s38
    %p42 = pneg %p36
    %p43 = scmp.eq.s32.totalorder %s15, 1
    %p44 = por %p42, %p43
    %p45 = scmp.ne.s32.totalorder %s37, %s40
    %p46 = scmp.eq.s32.totalorder %s15, 0
    %p47 = por %p45, %p46
    %p48 = scmp.ne.s32.totalorder %s37, %s40
    %p49 = scmp.eq.s32.totalorder %s20, 1
    %p50 = por %p48, %p49
    %p51 = scmp.ne.s32.totalorder %s40, %s41
    %p52 = scmp.eq.s32.totalorder %s20, 0
    %p53 = por %p51, %p52
    %p54 = scmp.ne.s32.totalorder %s40, %s41
    %p55 = scmp.eq.s32.totalorder %s21, 1
    %p56 = por %p54, %p55
    %p58 = scmp.ne.s32.totalorder %s41, %s57
    %p59 = scmp.eq.s32.totalorder %s21, 0
    %p60 = por %p58, %p59
    %s61 = ssub.s32 %s22, %s34
    %s62 = ssub.s32 %s23, %s30
    %s63 = sor.u32 %s61, %s62
    %p64 = scmp.eq.s32.totalorder %s63, 0
    %s66 = sadd.s32 %s65, 1
    %s67 = scalar_select %p64, %s65, %s66
    %p70 = pneg %p64
    %p71 = scmp.eq.s32.totalorder %s15, 1
    %p72 = por %p70, %p71
    %p73 = scmp.ne.s32.totalorder %s65, %s68
    %p74 = scmp.eq.s32.totalorder %s15, 0
    %p75 = por %p73, %p74
    %p76 = scmp.ne.s32.totalorder %s65, %s68
    %p77 = scmp.eq.s32.totalorder %s20, 1
    %p78 = por %p76, %p77
    %p79 = scmp.ne.s32.totalorder %s68, %s69
    %p80 = scmp.eq.s32.totalorder %s20, 0
    %p81 = por %p79, %p80
    %p82 = scmp.ne.s32.totalorder %s68, %s69
    %p83 = scmp.eq.s32.totalorder %s21, 1
    %p84 = por %p82, %p83
    %p86 = scmp.ne.s32.totalorder %s69, %s85
    %p87 = scmp.eq.s32.totalorder %s21, 0
    %p88 = por %p86, %p87
    %s89 = ssub.s32 %s22, %s34
    %s90 = ssub.s32 %s23, %s30
    %s91 = sor.u32 %s89, %s90
    %p92 = scmp.eq.s32.totalorder %s91, 0
    %s94 = sadd.s32 %s93, 1
    %s95 = scalar_select %p92, %s93, %s94
    %p98 = pneg %p92
    %p99 = scmp.eq.s32.totalorder %s15, 1
    %p100 = por %p98, %p99
    %p101 = scmp.ne.s32.totalorder %s93, %s96
    %p102 = scmp.eq.s32.totalorder %s15, 0
    %p103 = por %p101, %p102
    %p104 = scmp.ne.s32.totalorder %s93, %s96
    %p105 = scmp.eq.s32.totalorder %s20, 1
    %p106 = por %p104, %p105
    %p107 = scmp.ne.s32.totalorder %s96, %s97
    %p108 = scmp.eq.s32.totalorder %s20, 0
    %p109 = por %p107, %p108
    %p110 = scmp.ne.s32.totalorder %s96, %s97
    %p111 = scmp.eq.s32.totalorder %s21, 1
    %p112 = por %p110, %p111
    %p114 = scmp.ne.s32.totalorder %s97, %s113
    %p115 = scmp.eq.s32.totalorder %s21, 0
    %p116 = por %p114, %p115
    %s117 = ssub.s32 %s22, %s34
    %s118 = ssub.s32 %s23, %s30
    %s119 = sor.u32 %s117, %s118
    %p120 = scmp.eq.s32.totalorder %s119, 0
    %s122 = sadd.s32 %s121, 1
    %s123 = scalar_select %p120, %s121, %s122
    %p126 = pneg %p120
    %p127 = scmp.eq.s32.totalorder %s15, 1
    %p128 = por %p126, %p127
    %p129 = scmp.ne.s32.totalorder %s121, %s124
    %p130 = scmp.eq.s32.totalorder %s15, 0
    %p131 = por %p129, %p130
    %p132 = scmp.ne.s32.totalorder %s121, %s124
    %p133 = scmp.eq.s32.totalorder %s20, 1
    %p134 = por %p132, %p133
    %p135 = scmp.ne.s32.totalorder %s124, %s125
    %p136 = scmp.eq.s32.totalorder %s20, 0
    %p137 = por %p135, %p136
    %p138 = scmp.ne.s32.totalorder %s124, %s125
    %p139 = scmp.eq.s32.totalorder %s21, 1
    %p140 = por %p138, %p139
    %p142 = scmp.ne.s32.totalorder %s125, %s141
    %p143 = scmp.eq.s32.totalorder %s21, 0
    %p144 = por %p142, %p143
    %s145 = ssub.s32 %s22, %s34
    %s146 = ssub.s32 %s23, %s30
    %s147 = sor.u32 %s145, %s146
    %p148 = scmp.eq.s32.totalorder %s147, 0
    %s150 = sadd.s32 %s149, 1
    %s151 = scalar_select %p148, %s149, %s150
    %p154 = pneg %p148
    %p155 = scmp.eq.s32.totalorder %s15, 1
    %p156 = por %p154, %p155
    %p157 = scmp.ne.s32.totalorder %s149, %s152
    %p158 = scmp.eq.s32.totalorder %s15, 0
    %p159 = por %p157, %p158
    %p160 = scmp.ne.s32.totalorder %s149, %s152
    %p161 = scmp.eq.s32.totalorder %s20, 1
    %p162 = por %p160, %p161
    %p163 = scmp.ne.s32.totalorder %s152, %s153
    %p164 = scmp.eq.s32.totalorder %s20, 0
    %p165 = por %p163, %p164
    %p166 = scmp.ne.s32.totalorder %s152, %s153
    %p167 = scmp.eq.s32.totalorder %s21, 1
    %p168 = por %p166, %p167
    %p170 = scmp.ne.s32.totalorder %s153, %s169
    %p171 = scmp.eq.s32.totalorder %s21, 0
    %p172 = por %p170, %p171
    %s173 = ssub.s32 %s22, %s34
    %s174 = ssub.s32 %s23, %s30
    %s175 = sor.u32 %s173, %s174
    %p176 = scmp.eq.s32.totalorder %s175, 0
    %s178 = sadd.s32 %s177, 1
    %s179 = scalar_select %p176, %s177, %s178
    %p182 = pneg %p176
    %p183 = scmp.eq.s32.totalorder %s15, 1
    %p184 = por %p182, %p183
    %p185 = scmp.ne.s32.totalorder %s177, %s180
    %p186 = scmp.eq.s32.totalorder %s15, 0
    %p187 = por %p185, %p186
    %p188 = scmp.ne.s32.totalorder %s177, %s180
    %p189 = scmp.eq.s32.totalorder %s20, 1
    %p190 = por %p188, %p189
    %p191 = scmp.ne.s32.totalorder %s180, %s181
    %p192 = scmp.eq.s32.totalorder %s20, 0
    %p193 = por %p191, %p192
    %p194 = scmp.ne.s32.totalorder %s180, %s181
    %p195 = scmp.eq.s32.totalorder %s21, 1
    %p196 = por %p194, %p195
    %p198 = scmp.ne.s32.totalorder %s181, %s197
    %p199 = scmp.eq.s32.totalorder %s21, 0
    %p200 = por %p198, %p199
    %s201 = ssub.s32 %s22, %s34
    %s202 = ssub.s32 %s23, %s30
    %s203 = sor.u32 %s201, %s202
    %p204 = scmp.eq.s32.totalorder %s203, 0
    %s206 = sadd.s32 %s205, 1
    %s207 = scalar_select %p204, %s205, %s206
    %p210 = pneg %p204
    %p211 = scmp.eq.s32.totalorder %s15, 1
    %p212 = por %p210, %p211
    %p213 = scmp.ne.s32.totalorder %s205, %s208
    %p214 = scmp.eq.s32.totalorder %s15, 0
    %p215 = por %p213, %p214
    %p216 = scmp.ne.s32.totalorder %s205, %s208
    %p217 = scmp.eq.s32.totalorder %s20, 1
    %p218 = por %p216, %p217
    %p219 = scmp.ne.s32.totalorder %s208, %s209
    %p220 = scmp.eq.s32.totalorder %s20, 0
    %p221 = por %p219, %p220
    %p222 = scmp.ne.s32.totalorder %s208, %s209
    %p223 = scmp.eq.s32.totalorder %s21, 1
    %p224 = por %p222, %p223
    %p226 = scmp.ne.s32.totalorder %s209, %s225
    %p227 = scmp.eq.s32.totalorder %s21, 0
    %p228 = por %p226, %p227
    %s229 = ssub.s32 %s22, %s34
    %s230 = ssub.s32 %s23, %s30
    %s231 = sor.u32 %s229, %s230
    %p232 = scmp.eq.s32.totalorder %s231, 0
    %s234 = sadd.s32 %s233, 1
    %s235 = scalar_select %p232, %s233, %s234
    %p238 = pneg %p232
    %p239 = scmp.eq.s32.totalorder %s15, 1
    %p240 = por %p238, %p239
    %p241 = scmp.ne.s32.totalorder %s233, %s236
    %p242 = scmp.eq.s32.totalorder %s15, 0
    %p243 = por %p241, %p242
    %p244 = scmp.ne.s32.totalorder %s233, %s236
    %p245 = scmp.eq.s32.totalorder %s20, 1
    %p246 = por %p244, %p245
    %p247 = scmp.ne.s32.totalorder %s236, %s237
    %p248 = scmp.eq.s32.totalorder %s20, 0
    %p249 = por %p247, %p248
    %p250 = scmp.ne.s32.totalorder %s236, %s237
    %p251 = scmp.eq.s32.totalorder %s21, 1
    %p252 = por %p250, %p251
    %p254 = scmp.ne.s32.totalorder %s237, %s253
    %p255 = scmp.eq.s32.totalorder %s21, 0
    %p256 = por %p254, %p255
    %s257 = ssub.s32 %s22, %s34
    %s258 = ssub.s32 %s23, %s30
    %s259 = sor.u32 %s257, %s258
    %p260 = scmp.eq.s32.totalorder %s259, 0
    %s262 = sadd.s32 %s261, 1
    %s263 = scalar_select %p260, %s261, %s262
    %p266 = pneg %p260
    %p267 = scmp.eq.s32.totalorder %s15, 1
    %p268 = por %p266, %p267
    %p269 = scmp.ne.s32.totalorder %s261, %s264
    %p270 = scmp.eq.s32.totalorder %s15, 0
    %p271 = por %p269, %p270
    %p272 = scmp.ne.s32.totalorder %s261, %s264
    %p273 = scmp.eq.s32.totalorder %s20, 1
    %p274 = por %p272, %p273
    %p275 = scmp.ne.s32.totalorder %s264, %s265
    %p276 = scmp.eq.s32.totalorder %s20, 0
    %p277 = por %p275, %p276
    %p278 = scmp.ne.s32.totalorder %s264, %s265
    %p279 = scmp.eq.s32.totalorder %s21, 1
    %p280 = por %p278, %p279
    %p282 = scmp.ne.s32.totalorder %s265, %s281
    %p283 = scmp.eq.s32.totalorder %s21, 0
    %p284 = por %p282, %p283
    %p285 = scmp.le.s32.totalorder 1, %s15
    %p286 = scmp.lt.s32.totalorder %s15, 3
    %p287 = pnand %p285, %p286
    %p288 = pneg %p287
    // Predicated region
    $region9: #{final_diff_code_block.1} parent=5 // pred_check
      _
    $region10: #{final_diff_code_block.1} parent=5 // pred_check_branch
      %290 = sbr.rel (%p287) target = $region12
    $region11: #{final_diff_code_block.1} parent=5 // pred_region
      %s291 = ssub.s32 %s15, 1
    $region12: #{final_diff_code_block.1} parent=5 // pred_fallthru
      _
    %p292 = scmp.lt.s32.totalorder %s15, 2
    // Predicated region
    $region13: #{final_diff_code_block.1} parent=5 // pred_check
      %p293 = pneg %p292
    $region14: #{final_diff_code_block.1} parent=5 // pred_check_branch
      %295 = sbr.rel (%p293) target = $region16
    $region15: #{final_diff_code_block.1} parent=5 // pred_region
      // Predicated region
      $region17: #{final_diff_code_block.1} parent=15 // pred_check
        %p296 = pneg %p47
      $region18: #{final_diff_code_block.1} parent=15 // pred_check_branch
        %298 = sbr.rel (%p296) target = $region20
      $region19: #{final_diff_code_block.1} parent=15 // pred_region
        %p299 = scmp.lt.s32.totalorder %s22, 1
        %s300 = scalar_select %p299, %s22, 1
        %s301 = smul.addr %s300, 4
        %s302 = smul.addr %s301, 4
        %s303 = scalar_lea.vmem %s0, %s302
      $region20: #{final_diff_code_block.1} parent=15 // pred_fallthru
        _
      // Predicated region
      $region21: #{final_diff_code_block.1} parent=15 // pred_check
        %p304 = pneg %p75
      $region22: #{final_diff_code_block.1} parent=15 // pred_check_branch
        %306 = sbr.rel (%p304) target = $region24
      $region23: #{final_diff_code_block.1} parent=15 // pred_region
        %s307 = smul.u32 4, %s23
        %p308 = scmp.lt.s32.totalorder %s22, 1
        %s309 = scalar_select %p308, %s22, 1
        %p310 = scmp.lt.s32.totalorder %s307, 3
        %s311 = scalar_select %p310, %s307, 3
        %s312 = smul.addr %s309, 4
        %s313 = sadd.s32 %s311, %s312
        %s314 = smul.addr %s313, 8
        %s315 = scalar_lea.vmem %s1, %s314
        %s316 = smul.u32 4, %s23
      $region24: #{final_diff_code_block.1} parent=15 // pred_fallthru
        _
      // Predicated region
      $region25: #{final_diff_code_block.1} parent=15 // pred_check
        %p317 = pneg %p103
      $region26: #{final_diff_code_block.1} parent=15 // pred_check_branch
        %319 = sbr.rel (%p317) target = $region28
      $region27: #{final_diff_code_block.1} parent=15 // pred_region
        %s320 = smul.u32 4, %s23
        %p321 = scmp.lt.s32.totalorder %s22, 1
        %s322 = scalar_select %p321, %s22, 1
        %p323 = scmp.lt.s32.totalorder %s320, 3
        %s324 = scalar_select %p323, %s320, 3
        %s325 = smul.addr %s322, 4
        %s326 = sadd.s32 %s324, %s325
        %s327 = smul.addr %s326, 8
        %s328 = scalar_lea.vmem %s2, %s327
        %s329 = smul.u32 4, %s23
      $region28: #{final_diff_code_block.1} parent=15 // pred_fallthru
        _
      // Predicated region
      $region29: #{final_diff_code_block.1} parent=15 // pred_check
        %p330 = pneg %p131
      $region30: #{final_diff_code_block.1} parent=15 // pred_check_branch
        %332 = sbr.rel (%p330) target = $region32
      $region31: #{final_diff_code_block.1} parent=15 // pred_region
        %s333 = smul.u32 4, %s23
        %p334 = scmp.lt.s32.totalorder %s22, 1
        %s335 = scalar_select %p334, %s22, 1
        %p336 = scmp.lt.s32.totalorder %s333, 3
        %s337 = scalar_select %p336, %s333, 3
        %s338 = smul.addr %s335, 4
        %s339 = sadd.s32 %s337, %s338
        %s340 = smul.addr %s339, 8
        %s341 = scalar_lea.vmem %s3, %s340
        %s342 = smul.u32 4, %s23
      $region32: #{final_diff_code_block.1} parent=15 // pred_fallthru
        _
      // Predicated region
      $region33: #{final_diff_code_block.1} parent=15 // pred_check
        %p343 = pneg %p159
      $region34: #{final_diff_code_block.1} parent=15 // pred_check_branch
        %345 = sbr.rel (%p343) target = $region36
      $region35: #{final_diff_code_block.1} parent=15 // pred_region
        %s346 = smul.u32 4, %s23
        %p347 = scmp.lt.s32.totalorder %s22, 1
        %s348 = scalar_select %p347, %s22, 1
        %p349 = scmp.lt.s32.totalorder %s346, 3
        %s350 = scalar_select %p349, %s346, 3
        %s351 = smul.addr %s348, 4
        %s352 = sadd.s32 %s350, %s351
        %s353 = smul.addr %s352, 8
        %s354 = scalar_lea.vmem %s4, %s353
        %s355 = smul.u32 4, %s23
      $region36: #{final_diff_code_block.1} parent=15 // pred_fallthru
        _
    $region16: #{final_diff_code_block.1} parent=5 // pred_fallthru
      _
    %p356 = scmp.le.s32.totalorder 1, %s15
    %p357 = scmp.lt.s32.totalorder %s15, 3
    %p358 = pnand %p356, %p357
    %p359 = pneg %p358
    // Predicated region
    $region37: #{final_diff_code_block.1} parent=5 // pred_check
      _
    $region38: #{final_diff_code_block.1} parent=5 // pred_check_branch
      %361 = sbr.rel (%p358) target = $region40
    $region39: #{final_diff_code_block.1} parent=5 // pred_region
      %s362 = ssub.s32 %s15, 1
      %p363 = scmp.lt.s32.totalorder %s24, 1
      %s364 = scalar_select %p363, %s24, 1
      %s365 = smul.addr %s364, 4
      %s366 = smul.addr %s365, 4
      %s367 = scalar_lea.vmem %s0, %s366
      %p368 = pneg %p53
      %p369 = pneg %p50
      %s370 = smul.u32 4, %s25
      %p371 = scmp.lt.s32.totalorder %s24, 1
      %s372 = scalar_select %p371, %s24, 1
      %p373 = scmp.lt.s32.totalorder %s370, 3
      %s374 = scalar_select %p373, %s370, 3
      %s375 = smul.addr %s372, 4
      %s376 = sadd.s32 %s374, %s375
      %s377 = smul.addr %s376, 8
      %s378 = scalar_lea.vmem %s1, %s377
      %p379 = pneg %p81
      %p380 = pneg %p78
      %s381 = smul.u32 4, %s25
      %p382 = scmp.lt.s32.totalorder %s24, 1
      %s383 = scalar_select %p382, %s24, 1
      %p384 = scmp.lt.s32.totalorder %s381, 3
      %s385 = scalar_select %p384, %s381, 3
      %s386 = smul.addr %s383, 4
      %s387 = sadd.s32 %s385, %s386
      %s388 = smul.addr %s387, 8
      %s389 = scalar_lea.vmem %s2, %s388
      %p390 = pneg %p109
      %p391 = pneg %p106
      %s392 = smul.u32 4, %s25
      %p393 = scmp.lt.s32.totalorder %s24, 1
      %s394 = scalar_select %p393, %s24, 1
      %p395 = scmp.lt.s32.totalorder %s392, 3
      %s396 = scalar_select %p395, %s392, 3
      %s397 = smul.addr %s394, 4
      %s398 = sadd.s32 %s396, %s397
      %s399 = smul.addr %s398, 8
      %s400 = scalar_lea.vmem %s3, %s399
      %p401 = pneg %p137
      %p402 = pneg %p134
      %s403 = smul.u32 4, %s25
      %p404 = scmp.lt.s32.totalorder %s24, 1
      %s405 = scalar_select %p404, %s24, 1
      %p406 = scmp.lt.s32.totalorder %s403, 3
      %s407 = scalar_select %p406, %s403, 3
      %s408 = smul.addr %s405, 4
      %s409 = sadd.s32 %s407, %s408
      %s410 = smul.addr %s409, 8
      %s411 = scalar_lea.vmem %s4, %s410
      %p412 = pneg %p165
      %p413 = pneg %p162
      %p414 = pneg %p193
      %p415 = pneg %p190
      %s416 = smul.u32 4, %s25
      %p417 = scmp.lt.s32.totalorder %s24, 1
      %s418 = scalar_select %p417, %s24, 1
      %p419 = scmp.lt.s32.totalorder %s416, 3
      %s420 = scalar_select %p419, %s416, 3
      %s421 = smul.addr %s418, 4
      %s422 = sadd.s32 %s420, %s421
      %s423 = smul.addr %s422, 8
      %s424 = scalar_lea.vmem %s5, %s423
      %p425 = pneg %p221
      %p426 = pneg %p218
      %s427 = smul.u32 4, %s25
      %p428 = scmp.lt.s32.totalorder %s24, 1
      %s429 = scalar_select %p428, %s24, 1
      %p430 = scmp.lt.s32.totalorder %s427, 3
      %s431 = scalar_select %p430, %s427, 3
      %s432 = smul.addr %s429, 4
      %s433 = sadd.s32 %s431, %s432
      %s434 = smul.addr %s433, 8
      %s435 = scalar_lea.vmem %s6, %s434
      %p436 = pneg %p249
      %p437 = pneg %p246
      %s438 = smul.u32 4, %s25
      %p439 = scmp.lt.s32.totalorder %s24, 1
      %s440 = scalar_select %p439, %s24, 1
      %p441 = scmp.lt.s32.totalorder %s438, 3
      %s442 = scalar_select %p441, %s438, 3
      %s443 = smul.addr %s440, 4
      %s444 = sadd.s32 %s442, %s443
      %s445 = smul.addr %s444, 8
      %s446 = scalar_lea.vmem %s7, %s445
      %p447 = pneg %p277
      %p448 = pneg %p274
      %s449 = smul.u32 4, %s25
      %p450 = scmp.lt.s32.totalorder %s24, 1
      %s451 = scalar_select %p450, %s24, 1
      %p452 = scmp.lt.s32.totalorder %s449, 3
      %s453 = scalar_select %p452, %s449, 3
      %s454 = smul.addr %s451, 4
      %s455 = sadd.s32 %s453, %s454
      %s456 = smul.addr %s455, 8
      %s457 = scalar_lea.vmem %s8, %s456
      %p458 = scmp.lt.s32.totalorder %s24, 1
      %s459 = scalar_select %p458, %s24, 1
      %s460 = smul.addr %s459, 4
      %s461 = smul.addr %s460, 4
      %s462 = scalar_lea.vmem %s0, %s461
      %s463 = smul.u32 4, %s25
      %p464 = scmp.lt.s32.totalorder %s24, 1
      %s465 = scalar_select %p464, %s24, 1
      %p466 = scmp.lt.s32.totalorder %s463, 3
      %s467 = scalar_select %p466, %s463, 3
      %s468 = smul.addr %s465, 4
      %s469 = sadd.s32 %s467, %s468
      %s470 = smul.addr %s469, 8
      %s471 = scalar_lea.vmem %s1, %s470
      %s472 = smul.u32 4, %s25
      %s473 = smul.u32 4, %s25
      %p474 = scmp.lt.s32.totalorder %s24, 1
      %s475 = scalar_select %p474, %s24, 1
      %p476 = scmp.lt.s32.totalorder %s473, 3
      %s477 = scalar_select %p476, %s473, 3
      %s478 = smul.addr %s475, 4
      %s479 = sadd.s32 %s477, %s478
      %s480 = smul.addr %s479, 8
      %s481 = scalar_lea.vmem %s2, %s480
      %s482 = smul.u32 4, %s25
      %s483 = smul.u32 4, %s25
      %p484 = scmp.lt.s32.totalorder %s24, 1
      %s485 = scalar_select %p484, %s24, 1
      %p486 = scmp.lt.s32.totalorder %s483, 3
      %s487 = scalar_select %p486, %s483, 3
      %s488 = smul.addr %s485, 4
      %s489 = sadd.s32 %s487, %s488
      %s490 = smul.addr %s489, 8
      %s491 = scalar_lea.vmem %s3, %s490
      %s492 = smul.u32 4, %s25
      %s493 = smul.u32 4, %s25
      %p494 = scmp.lt.s32.totalorder %s24, 1
      %s495 = scalar_select %p494, %s24, 1
      %p496 = scmp.lt.s32.totalorder %s493, 3
      %s497 = scalar_select %p496, %s493, 3
      %s498 = smul.addr %s495, 4
      %s499 = sadd.s32 %s497, %s498
      %s500 = smul.addr %s499, 8
      %s501 = scalar_lea.vmem %s4, %s500
      %s502 = smul.u32 4, %s25
      %s503 = smul.u32 4, %s25
      %p504 = scmp.lt.s32.totalorder %s24, 1
      %s505 = scalar_select %p504, %s24, 1
      %p506 = scmp.lt.s32.totalorder %s503, 3
      %s507 = scalar_select %p506, %s503, 3
      %s508 = smul.addr %s505, 4
      %s509 = sadd.s32 %s507, %s508
      %s510 = smul.addr %s509, 8
      %s511 = scalar_lea.vmem %s5, %s510
      %s512 = smul.u32 4, %s25
      %s513 = smul.u32 4, %s25
      %p514 = scmp.lt.s32.totalorder %s24, 1
      %s515 = scalar_select %p514, %s24, 1
      %p516 = scmp.lt.s32.totalorder %s513, 3
      %s517 = scalar_select %p516, %s513, 3
      %s518 = smul.addr %s515, 4
      %s519 = sadd.s32 %s517, %s518
      %s520 = smul.addr %s519, 8
      %s521 = scalar_lea.vmem %s6, %s520
      %s522 = smul.u32 4, %s25
      %s523 = smul.u32 4, %s25
      %p524 = scmp.lt.s32.totalorder %s24, 1
      %s525 = scalar_select %p524, %s24, 1
      %p526 = scmp.lt.s32.totalorder %s523, 3
      %s527 = scalar_select %p526, %s523, 3
      %s528 = smul.addr %s525, 4
      %s529 = sadd.s32 %s527, %s528
      %s530 = smul.addr %s529, 8
      %s531 = scalar_lea.vmem %s7, %s530
      %s532 = smul.u32 4, %s25
      %s533 = smul.u32 4, %s25
      %p534 = scmp.lt.s32.totalorder %s24, 1
      %s535 = scalar_select %p534, %s24, 1
      %p536 = scmp.lt.s32.totalorder %s533, 3
      %s537 = scalar_select %p536, %s533, 3
      %s538 = smul.addr %s535, 4
      %s539 = sadd.s32 %s537, %s538
      %s540 = smul.addr %s539, 8
      %s541 = scalar_lea.vmem %s8, %s540
      %s542 = smul.u32 4, %s25
      %v543 = vld [vmem:[%s471] sm:$0xff]
      %v544 = vld [vmem:[%s471 + $0x8] sm:$0xff]
      %v545 = vld [vmem:[%s471 + $0x10] sm:$0xff]
      %v546 = vld [vmem:[%s471 + $0x18] sm:$0xff]
      %v547 = vld [vmem:[%s481] sm:$0xff]
      %v548 = vld [vmem:[%s481 + $0x8] sm:$0xff]
      %v549 = vld [vmem:[%s481 + $0x10] sm:$0xff]
      %v550 = vld [vmem:[%s481 + $0x18] sm:$0xff]
      %v551 = vld [vmem:[%s491] sm:$0xff]
      %v552 = vld [vmem:[%s491 + $0x8] sm:$0xff]
      %v553 = vld [vmem:[%s491 + $0x10] sm:$0xff]
      %v554 = vld [vmem:[%s491 + $0x18] sm:$0xff]
      %v555 = vld [vmem:[%s501] sm:$0xff]
      %v556 = vld [vmem:[%s501 + $0x8] sm:$0xff]
      %v557 = vld [vmem:[%s501 + $0x10] sm:$0xff]
      %v558 = vld [vmem:[%s501 + $0x18] sm:$0xff]
      %v559 = vld [vmem:[%s462] sm:$0xf]
      %v560 = vld [vmem:[%s462 + $0x4] sm:$0xf]
      %v561 = vld [vmem:[%s462 + $0x8] sm:$0xf]
      %v562 = vld [vmem:[%s462 + $0xc] sm:$0xf]
      %v563 = vperm.slane %v559, 0
      %v564 = vlaneseq
      %v565 = vshrl.u32 %v564, 7
      %567 = vset.pattern.permute.xlu0 %v565
      %568 = vperm.xlu0 %567, %v563
      %v569 = vpop.permute.xlu0 %568
      %v570 = vmul.f32 %v569, %v543
      %v571 = vmul.f32 %v569, %v544
      %v572 = vmul.f32 %v569, %v545
      %v573 = vmul.f32 %v569, %v546
      %v574 = vperm.slane %v559, 1
      %v575 = vlaneseq
      %v576 = vshrl.u32 %v575, 7
      %578 = vset.pattern.permute.xlu0 %v576
      %579 = vperm.xlu0 %578, %v574
      %v580 = vpop.permute.xlu0 %579
      %v581 = vmul.f32 %v580, %v547
      %v582 = vmul.f32 %v580, %v548
      %v583 = vmul.f32 %v580, %v549
      %v584 = vmul.f32 %v580, %v550
      %v585 = vadd.f32 %v570, %v581
      %v586 = vadd.f32 %v571, %v582
      %v587 = vadd.f32 %v572, %v583
      %v588 = vadd.f32 %v573, %v584
      %v589 = vperm.slane %v559, 2
      %v590 = vlaneseq
      %v591 = vshrl.u32 %v590, 7
      %593 = vset.pattern.permute.xlu0 %v591
      %594 = vperm.xlu0 %593, %v589
      %v595 = vpop.permute.xlu0 %594
      %v596 = vmul.f32 %v595, %v551
      %v597 = vmul.f32 %v595, %v552
      %v598 = vmul.f32 %v595, %v553
      %v599 = vmul.f32 %v595, %v554
      %v600 = vadd.f32 %v585, %v596
      %v601 = vadd.f32 %v586, %v597
      %v602 = vadd.f32 %v587, %v598
      %v603 = vadd.f32 %v588, %v599
      %v604 = vperm.slane %v559, 3
      %v605 = vlaneseq
      %v606 = vshrl.u32 %v605, 7
      %608 = vset.pattern.permute.xlu0 %v606
      %609 = vperm.xlu0 %608, %v604
      %v610 = vpop.permute.xlu0 %609
      %v611 = vmul.f32 %v610, %v555
      %v612 = vmul.f32 %v610, %v556
      %v613 = vmul.f32 %v610, %v557
      %v614 = vmul.f32 %v610, %v558
      %v615 = vadd.f32 %v600, %v611
      %v616 = vadd.f32 %v601, %v612
      %v617 = vadd.f32 %v602, %v613
      %v618 = vadd.f32 %v603, %v614
      %619 = vst [vmem:[%s511] sm:$0xff] %v615
      %620 = vst [vmem:[%s511 + $0x8] sm:$0xff] %v616
      %621 = vst [vmem:[%s511 + $0x10] sm:$0xff] %v617
      %622 = vst [vmem:[%s511 + $0x18] sm:$0xff] %v618
      %v623 = vperm.slane %v560, 0
      %v624 = vlaneseq
      %v625 = vshrl.u32 %v624, 7
      %627 = vset.pattern.permute.xlu0 %v625
      %628 = vperm.xlu0 %627, %v623
      %v629 = vpop.permute.xlu0 %628
      %v630 = vmul.f32 %v629, %v543
      %v631 = vmul.f32 %v629, %v544
      %v632 = vmul.f32 %v629, %v545
      %v633 = vmul.f32 %v629, %v546
      %v634 = vperm.slane %v560, 1
      %v635 = vlaneseq
      %v636 = vshrl.u32 %v635, 7
      %638 = vset.pattern.permute.xlu0 %v636
      %639 = vperm.xlu0 %638, %v634
      %v640 = vpop.permute.xlu0 %639
      %v641 = vmul.f32 %v640, %v547
      %v642 = vmul.f32 %v640, %v548
      %v643 = vmul.f32 %v640, %v549
      %v644 = vmul.f32 %v640, %v550
      %v645 = vadd.f32 %v630, %v641
      %v646 = vadd.f32 %v631, %v642
      %v647 = vadd.f32 %v632, %v643
      %v648 = vadd.f32 %v633, %v644
      %v649 = vperm.slane %v560, 2
      %v650 = vlaneseq
      %v651 = vshrl.u32 %v650, 7
      %653 = vset.pattern.permute.xlu0 %v651
      %654 = vperm.xlu0 %653, %v649
      %v655 = vpop.permute.xlu0 %654
      %v656 = vmul.f32 %v655, %v551
      %v657 = vmul.f32 %v655, %v552
      %v658 = vmul.f32 %v655, %v553
      %v659 = vmul.f32 %v655, %v554
      %v660 = vadd.f32 %v645, %v656
      %v661 = vadd.f32 %v646, %v657
      %v662 = vadd.f32 %v647, %v658
      %v663 = vadd.f32 %v648, %v659
      %v664 = vperm.slane %v560, 3
      %v665 = vlaneseq
      %v666 = vshrl.u32 %v665, 7
      %668 = vset.pattern.permute.xlu0 %v666
      %669 = vperm.xlu0 %668, %v664
      %v670 = vpop.permute.xlu0 %669
      %v671 = vmul.f32 %v670, %v555
      %v672 = vmul.f32 %v670, %v556
      %v673 = vmul.f32 %v670, %v557
      %v674 = vmul.f32 %v670, %v558
      %v675 = vadd.f32 %v660, %v671
      %v676 = vadd.f32 %v661, %v672
      %v677 = vadd.f32 %v662, %v673
      %v678 = vadd.f32 %v663, %v674
      %679 = vst [vmem:[%s521] sm:$0xff] %v675
      %680 = vst [vmem:[%s521 + $0x8] sm:$0xff] %v676
      %681 = vst [vmem:[%s521 + $0x10] sm:$0xff] %v677
      %682 = vst [vmem:[%s521 + $0x18] sm:$0xff] %v678
      %v683 = vperm.slane %v561, 0
      %v684 = vlaneseq
      %v685 = vshrl.u32 %v684, 7
      %687 = vset.pattern.permute.xlu0 %v685
      %688 = vperm.xlu0 %687, %v683
      %v689 = vpop.permute.xlu0 %688
      %v690 = vmul.f32 %v689, %v543
      %v691 = vmul.f32 %v689, %v544
      %v692 = vmul.f32 %v689, %v545
      %v693 = vmul.f32 %v689, %v546
      %v694 = vperm.slane %v561, 1
      %v695 = vlaneseq
      %v696 = vshrl.u32 %v695, 7
      %698 = vset.pattern.permute.xlu0 %v696
      %699 = vperm.xlu0 %698, %v694
      %v700 = vpop.permute.xlu0 %699
      %v701 = vmul.f32 %v700, %v547
      %v702 = vmul.f32 %v700, %v548
      %v703 = vmul.f32 %v700, %v549
      %v704 = vmul.f32 %v700, %v550
      %v705 = vadd.f32 %v690, %v701
      %v706 = vadd.f32 %v691, %v702
      %v707 = vadd.f32 %v692, %v703
      %v708 = vadd.f32 %v693, %v704
      %v709 = vperm.slane %v561, 2
      %v710 = vlaneseq
      %v711 = vshrl.u32 %v710, 7
      %713 = vset.pattern.permute.xlu0 %v711
      %714 = vperm.xlu0 %713, %v709
      %v715 = vpop.permute.xlu0 %714
      %v716 = vmul.f32 %v715, %v551
      %v717 = vmul.f32 %v715, %v552
      %v718 = vmul.f32 %v715, %v553
      %v719 = vmul.f32 %v715, %v554
      %v720 = vadd.f32 %v705, %v716
      %v721 = vadd.f32 %v706, %v717
      %v722 = vadd.f32 %v707, %v718
      %v723 = vadd.f32 %v708, %v719
      %v724 = vperm.slane %v561, 3
      %v725 = vlaneseq
      %v726 = vshrl.u32 %v725, 7
      %728 = vset.pattern.permute.xlu0 %v726
      %729 = vperm.xlu0 %728, %v724
      %v730 = vpop.permute.xlu0 %729
      %v731 = vmul.f32 %v730, %v555
      %v732 = vmul.f32 %v730, %v556
      %v733 = vmul.f32 %v730, %v557
      %v734 = vmul.f32 %v730, %v558
      %v735 = vadd.f32 %v720, %v731
      %v736 = vadd.f32 %v721, %v732
      %v737 = vadd.f32 %v722, %v733
      %v738 = vadd.f32 %v723, %v734
      %739 = vst [vmem:[%s531] sm:$0xff] %v735
      %740 = vst [vmem:[%s531 + $0x8] sm:$0xff] %v736
      %741 = vst [vmem:[%s531 + $0x10] sm:$0xff] %v737
      %742 = vst [vmem:[%s531 + $0x18] sm:$0xff] %v738
      %v743 = vperm.slane %v562, 0
      %v744 = vlaneseq
      %v745 = vshrl.u32 %v744, 7
      %747 = vset.pattern.permute.xlu0 %v745
      %748 = vperm.xlu0 %747, %v743
      %v749 = vpop.permute.xlu0 %748
      %v750 = vmul.f32 %v749, %v543
      %v751 = vmul.f32 %v749, %v544
      %v752 = vmul.f32 %v749, %v545
      %v753 = vmul.f32 %v749, %v546
      %v754 = vperm.slane %v562, 1
      %v755 = vlaneseq
      %v756 = vshrl.u32 %v755, 7
      %758 = vset.pattern.permute.xlu0 %v756
      %759 = vperm.xlu0 %758, %v754
      %v760 = vpop.permute.xlu0 %759
      %v761 = vmul.f32 %v760, %v547
      %v762 = vmul.f32 %v760, %v548
      %v763 = vmul.f32 %v760, %v549
      %v764 = vmul.f32 %v760, %v550
      %v765 = vadd.f32 %v750, %v761
      %v766 = vadd.f32 %v751, %v762
      %v767 = vadd.f32 %v752, %v763
      %v768 = vadd.f32 %v753, %v764
      %v769 = vperm.slane %v562, 2
      %v770 = vlaneseq
      %v771 = vshrl.u32 %v770, 7
      %773 = vset.pattern.permute.xlu0 %v771
      %774 = vperm.xlu0 %773, %v769
      %v775 = vpop.permute.xlu0 %774
      %v776 = vmul.f32 %v775, %v551
      %v777 = vmul.f32 %v775, %v552
      %v778 = vmul.f32 %v775, %v553
      %v779 = vmul.f32 %v775, %v554
      %v780 = vadd.f32 %v765, %v776
      %v781 = vadd.f32 %v766, %v777
      %v782 = vadd.f32 %v767, %v778
      %v783 = vadd.f32 %v768, %v779
      %v784 = vperm.slane %v562, 3
      %v785 = vlaneseq
      %v786 = vshrl.u32 %v785, 7
      %788 = vset.pattern.permute.xlu0 %v786
      %789 = vperm.xlu0 %788, %v784
      %v790 = vpop.permute.xlu0 %789
      %v791 = vmul.f32 %v790, %v555
      %v792 = vmul.f32 %v790, %v556
      %v793 = vmul.f32 %v790, %v557
      %v794 = vmul.f32 %v790, %v558
      %v795 = vadd.f32 %v780, %v791
      %v796 = vadd.f32 %v781, %v792
      %v797 = vadd.f32 %v782, %v793
      %v798 = vadd.f32 %v783, %v794
      %799 = vst [vmem:[%s541] sm:$0xff] %v795
      %800 = vst [vmem:[%s541 + $0x8] sm:$0xff] %v796
      %801 = vst [vmem:[%s541 + $0x10] sm:$0xff] %v797
      %802 = vst [vmem:[%s541 + $0x18] sm:$0xff] %v798
      %s803 = smul.u32 4, %s25
      %p804 = scmp.lt.s32.totalorder %s24, 1
      %s805 = scalar_select %p804, %s24, 1
      %p806 = scmp.lt.s32.totalorder %s803, 3
      %s807 = scalar_select %p806, %s803, 3
      %s808 = smul.addr %s805, 4
      %s809 = sadd.s32 %s807, %s808
      %s810 = smul.addr %s809, 8
      %s811 = scalar_lea.vmem %s5, %s810
      %s812 = smul.u32 4, %s25
      %p813 = scmp.lt.s32.totalorder %s24, 1
      %s814 = scalar_select %p813, %s24, 1
      %p815 = scmp.lt.s32.totalorder %s812, 3
      %s816 = scalar_select %p815, %s812, 3
      %s817 = smul.addr %s814, 4
      %s818 = sadd.s32 %s816, %s817
      %s819 = smul.addr %s818, 8
      %s820 = scalar_lea.vmem %s6, %s819
      %s821 = smul.u32 4, %s25
      %p822 = scmp.lt.s32.totalorder %s24, 1
      %s823 = scalar_select %p822, %s24, 1
      %p824 = scmp.lt.s32.totalorder %s821, 3
      %s825 = scalar_select %p824, %s821, 3
      %s826 = smul.addr %s823, 4
      %s827 = sadd.s32 %s825, %s826
      %s828 = smul.addr %s827, 8
      %s829 = scalar_lea.vmem %s7, %s828
      %s830 = smul.u32 4, %s25
      %p831 = scmp.lt.s32.totalorder %s24, 1
      %s832 = scalar_select %p831, %s24, 1
      %p833 = scmp.lt.s32.totalorder %s830, 3
      %s834 = scalar_select %p833, %s830, 3
      %s835 = smul.addr %s832, 4
      %s836 = sadd.s32 %s834, %s835
      %s837 = smul.addr %s836, 8
      %s838 = scalar_lea.vmem %s8, %s837
      // Predicated region
      $region41: #{final_diff_code_block.1} parent=39 // pred_check
        %p839 = pneg %p190
      $region42: #{final_diff_code_block.1} parent=39 // pred_check_branch
        %841 = sbr.rel (%p839) target = $region44
      $region43: #{final_diff_code_block.1} parent=39 // pred_region
        %s842 = smul.u32 4, %s25
      $region44: #{final_diff_code_block.1} parent=39 // pred_fallthru
        _
      // Predicated region
      $region45: #{final_diff_code_block.1} parent=39 // pred_check
        %p843 = pneg %p218
      $region46: #{final_diff_code_block.1} parent=39 // pred_check_branch
        %845 = sbr.rel (%p843) target = $region48
      $region47: #{final_diff_code_block.1} parent=39 // pred_region
        %s846 = smul.u32 4, %s25
      $region48: #{final_diff_code_block.1} parent=39 // pred_fallthru
        _
      // Predicated region
      $region49: #{final_diff_code_block.1} parent=39 // pred_check
        %p847 = pneg %p246
      $region50: #{final_diff_code_block.1} parent=39 // pred_check_branch
        %849 = sbr.rel (%p847) target = $region52
      $region51: #{final_diff_code_block.1} parent=39 // pred_region
        %s850 = smul.u32 4, %s25
      $region52: #{final_diff_code_block.1} parent=39 // pred_fallthru
        _
      // Predicated region
      $region53: #{final_diff_code_block.1} parent=39 // pred_check
        %p851 = pneg %p274
      $region54: #{final_diff_code_block.1} parent=39 // pred_check_branch
        %853 = sbr.rel (%p851) target = $region56
      $region55: #{final_diff_code_block.1} parent=39 // pred_region
        %s854 = smul.u32 4, %s25
      $region56: #{final_diff_code_block.1} parent=39 // pred_fallthru
        _
    $region40: #{final_diff_code_block.1} parent=5 // pred_fallthru
      _
    %p855 = scmp.le.s32.totalorder 2, %s15
    // Predicated region
    $region57: #{final_diff_code_block.1} parent=5 // pred_check
      %p856 = pneg %p855
    $region58: #{final_diff_code_block.1} parent=5 // pred_check_branch
      %858 = sbr.rel (%p856) target = $region60
    $region59: #{final_diff_code_block.1} parent=5 // pred_region
      %s859 = ssub.s32 %s15, 2
      // Predicated region
      $region61: #{final_diff_code_block.1} parent=59 // pred_check
        %p860 = pneg %p196
      $region62: #{final_diff_code_block.1} parent=59 // pred_check_branch
        %862 = sbr.rel (%p860) target = $region64
      $region63: #{final_diff_code_block.1} parent=59 // pred_region
        %s863 = smul.u32 4, %s27
        %p864 = scmp.lt.s32.totalorder %s26, 1
        %s865 = scalar_select %p864, %s26, 1
        %p866 = scmp.lt.s32.totalorder %s863, 3
        %s867 = scalar_select %p866, %s863, 3
        %s868 = smul.addr %s865, 4
        %s869 = sadd.s32 %s867, %s868
        %s870 = smul.addr %s869, 8
        %s871 = scalar_lea.vmem %s5, %s870
      $region64: #{final_diff_code_block.1} parent=59 // pred_fallthru
        _
      // Predicated region
      $region65: #{final_diff_code_block.1} parent=59 // pred_check
        %p872 = pneg %p224
      $region66: #{final_diff_code_block.1} parent=59 // pred_check_branch
        %874 = sbr.rel (%p872) target = $region68
      $region67: #{final_diff_code_block.1} parent=59 // pred_region
        %s875 = smul.u32 4, %s27
        %p876 = scmp.lt.s32.totalorder %s26, 1
        %s877 = scalar_select %p876, %s26, 1
        %p878 = scmp.lt.s32.totalorder %s875, 3
        %s879 = scalar_select %p878, %s875, 3
        %s880 = smul.addr %s877, 4
        %s881 = sadd.s32 %s879, %s880
        %s882 = smul.addr %s881, 8
        %s883 = scalar_lea.vmem %s6, %s882
      $region68: #{final_diff_code_block.1} parent=59 // pred_fallthru
        _
      // Predicated region
      $region69: #{final_diff_code_block.1} parent=59 // pred_check
        %p884 = pneg %p252
      $region70: #{final_diff_code_block.1} parent=59 // pred_check_branch
        %886 = sbr.rel (%p884) target = $region72
      $region71: #{final_diff_code_block.1} parent=59 // pred_region
        %s887 = smul.u32 4, %s27
        %p888 = scmp.lt.s32.totalorder %s26, 1
        %s889 = scalar_select %p888, %s26, 1
        %p890 = scmp.lt.s32.totalorder %s887, 3
        %s891 = scalar_select %p890, %s887, 3
        %s892 = smul.addr %s889, 4
        %s893 = sadd.s32 %s891, %s892
        %s894 = smul.addr %s893, 8
        %s895 = scalar_lea.vmem %s7, %s894
      $region72: #{final_diff_code_block.1} parent=59 // pred_fallthru
        _
      // Predicated region
      $region73: #{final_diff_code_block.1} parent=59 // pred_check
        %p896 = pneg %p280
      $region74: #{final_diff_code_block.1} parent=59 // pred_check_branch
        %898 = sbr.rel (%p896) target = $region76
      $region75: #{final_diff_code_block.1} parent=59 // pred_region
        %s899 = smul.u32 4, %s27
        %p900 = scmp.lt.s32.totalorder %s26, 1
        %s901 = scalar_select %p900, %s26, 1
        %p902 = scmp.lt.s32.totalorder %s899, 3
        %s903 = scalar_select %p902, %s899, 3
        %s904 = smul.addr %s901, 4
        %s905 = sadd.s32 %s903, %s904
        %s906 = smul.addr %s905, 8
        %s907 = scalar_lea.vmem %s8, %s906
      $region76: #{final_diff_code_block.1} parent=59 // pred_fallthru
        _
    $region60: #{final_diff_code_block.1} parent=5 // pred_fallthru
      _
  $region6: #{final_diff_code_block.1} parent=0 // loop_footer
    %s19 = sadd.s32 1, %s15
  $region7: #{final_diff_code_block.1} parent=0 // loop_footer_branch
    %14 = sbr.rel target = $region3
  $region8: #{final_diff_code_block.1} parent=0 // loop_exit
    _

</llo_original>
